<compile_context>
chip_gen: v7x
topology: tpu7x:2x2x1
jax: 0.10.0
libtpu: 0.0.40
codegen_flags: <defaults>
</compile_context>

<pallas_src>
import functools
import math

import jax
import jax.numpy as jnp
from jax.experimental import pallas as pl
from jax.experimental.pallas import tpu as pltpu


def _round_up(x, m):
    return (x + m - 1) // m * m


def _gcn_kernel(adj_ref, sup_ref, b_ref, o_ref, *, n_valid, tk, compute_dtype,
                sup_resident):
    """Grid step (i, k): o[i-block] += adj[i-block, k-block] @ support[k-block].

    K (axis 1) is the reduction axis and is last in the grid / "arbitrary";
    the output block index is constant across it, so the f32 output block is
    the accumulator.  Bias + ReLU happen in place on the final K step.
    """
    k = pl.program_id(1)

    @pl.when(k == 0)
    def _():
        o_ref[...] = jnp.zeros_like(o_ref)

    a = adj_ref[...].astype(compute_dtype)

    # adj is not padded and the grid uses cdiv, so the last K block may be
    # partial: its out-of-bounds lanes hold unspecified VMEM data.  Zero them
    # before they reach the f32 accumulator.  (Out-of-bounds *rows* only
    # pollute output rows that the partial-block writeback drops.)
    col = jax.lax.broadcasted_iota(jnp.int32, a.shape, 1)
    a = jnp.where(col < (n_valid - k * tk), a, jnp.zeros_like(a))

    if sup_resident:
        # Whole support matrix is resident in VMEM (DMA'd once); take the k-th
        # K-slab.  Support rows are padded to a multiple of tk in the wrapper,
        # so this dynamic slice never goes out of bounds.
        start = pl.multiple_of(k * tk, 128)
        s = sup_ref[pl.ds(start, tk), :]
    else:
        s = sup_ref[...]

    o_ref[...] += jnp.dot(a, s, preferred_element_type=jnp.float32)

    @pl.when(k == pl.num_programs(1) - 1)
    def _():
        o_ref[...] = jnp.maximum(o_ref[...] + b_ref[...], 0.0).astype(o_ref.dtype)


def gcn_forward(x, adj, weight, bias, *, compute_dtype=jnp.bfloat16,
                tm=None, tk=None, sup_resident=None):
    """relu(adj @ (x @ weight) + bias) with the adj matmul done in Pallas."""
    n, nfeat = x.shape
    nhid = weight.shape[1]
    assert adj.shape == (n, n)

    # Hoisted: the (N, nfeat, nhid) matmul is negligible next to the N^2 adj
    # stream; doing it in XLA keeps the kernel's row axis fully parallel.
    support = jnp.dot(x, weight, preferred_element_type=jnp.float32)

    nhid_p = _round_up(nhid, 128)          # lane-dense output stores
    n_ceil = _round_up(n, 128)
    adj_itemsize = adj.dtype.itemsize
    sup_itemsize = jnp.dtype(compute_dtype).itemsize

    # --- tile selection ----------------------------------------------------
    if tm is None:
        if n_ceil <= 256:
            tm = n_ceil                               # tiny graph: one block
        elif n_ceil <= 1024:
            tm = _round_up(n_ceil // 2, 128)          # >=2 row blocks (dual TC)
        else:
            tm = 512
    if tk is None:
        # ~8 MiB adj tiles amortize the ~0.35 us per-grid-step overhead even
        # against v7x's 3.2 TB/s HBM (tile-sweep: 512 -> ~85% of roofline).
        tk_target = max(128, (8 * 1024 * 1024) // (tm * adj_itemsize))
        tk = min(n_ceil, _round_up(tk_target, 128))

    grid = (pl.cdiv(n, tm), pl.cdiv(n, tk))
    num_k = grid[1]

    # --- support / bias staging (small; adj itself is fed unpadded) ---------
    sup_rows = num_k * tk                  # pad rows so in-kernel slices fit
    sup_p = (
        jnp.zeros((sup_rows, nhid_p), dtype=compute_dtype)
        .at[:n, :nhid].set(support.astype(compute_dtype))
    )
    bias_p = (
        jnp.zeros((1, nhid_p), dtype=jnp.float32)
        .at[0, :nhid].set(bias.astype(jnp.float32))
    )

    if sup_resident is None:
        # Keep the whole support matrix resident (one DMA for the whole grid)
        # when it is small; otherwise stream one K block per step.
        sup_resident = sup_rows * nhid_p * sup_itemsize <= 4 * 1024 * 1024

    if sup_resident:
        sup_spec = pl.BlockSpec((sup_rows, nhid_p), lambda i, k: (0, 0))
    else:
        sup_spec = pl.BlockSpec((tk, nhid_p), lambda i, k: (k, 0))

    # --- VMEM budget (double buffers) ---------------------------------------
    sup_block_rows = sup_rows if sup_resident else tk
    vmem_need = (
        2 * tm * tk * adj_itemsize                      # adj tiles (dominant)
        + 2 * sup_block_rows * nhid_p * sup_itemsize    # support
        + 2 * tm * nhid_p * 4                           # f32 output/accumulator
        + 2 * nhid_p * 4                                # bias
    )
    # Raise above v5e's 16 MiB scoped default; stay well under v7x's 64 MiB.
    vmem_limit = int(min(max(vmem_need + (8 << 20), 32 << 20), 48 << 20))

    kernel = functools.partial(
        _gcn_kernel, n_valid=n, tk=tk, compute_dtype=compute_dtype,
        sup_resident=sup_resident)

    out_p = pl.pallas_call(
        kernel,
        out_shape=jax.ShapeDtypeStruct((n, nhid_p), jnp.float32),
        grid_spec=pltpu.PrefetchScalarGridSpec(
            num_scalar_prefetch=0,
            grid=grid,
            in_specs=[
                # adj row-block x K-block: the dominant HBM stream (native
                # dtype, no wrapper pre-pass; cast to bf16 inside the kernel).
                pl.BlockSpec((tm, tk), lambda i, k: (i, k)),
                # support: resident (index-constant -> single DMA) or streamed.
                sup_spec,
                # bias: tiny resident block.
                pl.BlockSpec((1, nhid_p), lambda i, k: (0, 0)),
            ],
            out_specs=pl.BlockSpec((tm, nhid_p), lambda i, k: (i, 0)),
        ),
        compiler_params=pltpu.CompilerParams(
            # rows independent -> parallel (dual-TC on v7x); K is a reduction.
            dimension_semantics=("parallel", "arbitrary"),
            vmem_limit_bytes=vmem_limit,
        ),
    )(adj, sup_p, bias_p)

    return out_p[:, :nhid]


if __name__ == "__main__":
    # Small shapes consistent with the module.  N is deliberately NOT a
    # multiple of 128 so the ragged-edge masking path is exercised.
    N, NFEAT, NHID = 200, 32, 64

    key = jax.random.PRNGKey(0)
    kx, kadj, kw = jax.random.split(key, 3)

    # Node features.
    x = jax.random.normal(kx, (N, NFEAT), dtype=jnp.float32)

    # Dense symmetric "adjacency" (torch.spmm on a dense-equivalent matrix).
    a = jax.random.uniform(kadj, (N, N), dtype=jnp.float32)
    adj = (a + a.T) * 0.5

    # Parameter init mirroring nn.init.kaiming_uniform_ (fan_in, a=0):
    # uniform(-bound, bound), bound = sqrt(6 / fan_in); bias = 0.
    bound = math.sqrt(6.0 / NFEAT)
    weight = jax.random.uniform(
        kw, (NFEAT, NHID), dtype=jnp.float32, minval=-bound, maxval=bound
    )
    bias = jnp.zeros((NHID,), dtype=jnp.float32)

    # References.
    sup = jnp.dot(x, weight, preferred_element_type=jnp.float32)
    ref_bf16 = jnp.maximum(           # same bf16-on-MXU precision as kernel
        jnp.dot(adj.astype(jnp.bfloat16), sup.astype(jnp.bfloat16),
                preferred_element_type=jnp.float32) + bias[None, :],
        0.0,
    )
    ref_f32 = jnp.maximum(adj @ sup + bias[None, :], 0.0)   # pure f32 module math

    # 1) Auto tiling: single big block, ragged edges masked in-kernel.
    out = jax.block_until_ready(gcn_forward(x, adj, weight, bias))
    assert out.shape == (N, NHID)
    assert jnp.allclose(out, ref_bf16, atol=1e-2, rtol=1e-3)
    assert jnp.allclose(out, ref_f32, atol=0.5, rtol=0.05)

    # 2) Forced multi-block K reduction, resident-support (dynamic slice) path.
    out2 = jax.block_until_ready(
        gcn_forward(x, adj, weight, bias, tm=128, tk=128, sup_resident=True))
    assert jnp.allclose(out2, ref_bf16, atol=1e-2, rtol=1e-3)

    # 3) Streamed-support fallback path (large support matrices).
    out3 = jax.block_until_ready(
        gcn_forward(x, adj, weight, bias, tm=128, tk=128, sup_resident=False))
    assert jnp.allclose(out3, ref_bf16, atol=1e-2, rtol=1e-3)

    print("KERNEL_OK")
</pallas_src>

<mosaic_0001>
module attributes {stable_mosaic.version = 11 : i64} {
  func.func @_gcn_kernel(%arg0: i32, %arg1: i32, %arg2: memref<256x256xf32, #tpu.memory_space<vmem>>, %arg3: memref<256x128xbf16, #tpu.memory_space<vmem>>, %arg4: memref<1x128xf32, #tpu.memory_space<vmem>>, %arg5: memref<256x128xf32, #tpu.memory_space<vmem>>) attributes {dimension_semantics = [#tpu.dimension_semantics<parallel>, #tpu.dimension_semantics<arbitrary>], iteration_bounds = array<i64: 1, 1>, scalar_prefetch = 0 : i64, scratch_operands = 0 : i64, tpu.core_type = #tpu.core_type<tc>, window_params = [{transform_indices = @transform_0, window_bounds = array<i64: 256, 256>}, {pipeline_mode = #tpu.pipeline_mode<synchronous>, transform_indices = @transform_1, window_bounds = array<i64: 256, 128>}, {pipeline_mode = #tpu.pipeline_mode<synchronous>, transform_indices = @transform_2, window_bounds = array<i64: 1, 128>}, {transform_indices = @transform_3, window_bounds = array<i64: 256, 128>}]} {
    %c0_i32 = arith.constant 0 : i32
    %0 = arith.cmpi eq, %arg1, %c0_i32 : i32
    %1 = arith.extui %0 : i1 to i32
    %c0_i32_0 = arith.constant 0 : i32
    %2 = arith.cmpi ne, %1, %c0_i32_0 : i32
    scf.if %2 {
      %cst_11 = arith.constant 0.000000e+00 : f32
      %23 = vector.broadcast %cst_11 : f32 to vector<256x128xf32>
      %c0_12 = arith.constant 0 : index
      %c0_13 = arith.constant 0 : index
      %24 = vector.load %arg5[%c0_12, %c0_13] : memref<256x128xf32, #tpu.memory_space<vmem>>, vector<256x128xf32>
      tpu.vector_store %arg5[%c0_12, %c0_13], %23 {strides = array<i32>} : memref<256x128xf32, #tpu.memory_space<vmem>>, vector<256x128xf32>,
    } else {
    }
    %c0 = arith.constant 0 : index
    %c0_1 = arith.constant 0 : index
    %3 = vector.load %arg2[%c0, %c0_1] : memref<256x256xf32, #tpu.memory_space<vmem>>, vector<256x256xf32>
    %4 = arith.truncf %3 : vector<256x256xf32> to vector<256x256xbf16>
    %5 = tpu.iota {dimensions = array<i32: 1>} : vector<256x256xi32>
    %c256_i32 = arith.constant 256 : i32
    %6 = arith.muli %arg1, %c256_i32 : i32
    %c200_i32 = arith.constant 200 : i32
    %7 = arith.subi %c200_i32, %6 : i32
    %8 = vector.broadcast %7 : i32 to vector<256x256xi32>
    %9 = arith.cmpi slt, %5, %8 : vector<256x256xi32>
    %cst = arith.constant 0.000000e+00 : bf16
    %10 = vector.broadcast %cst : bf16 to vector<256x256xbf16>
    %11 = arith.select %9, %4, %10 : vector<256x256xi1>, vector<256x256xbf16>
    %c256_i32_2 = arith.constant 256 : i32
    %12 = arith.muli %arg1, %c256_i32_2 : i32
    %13 = tpu.assume_multiple %12, 128 : i32
    %14 = arith.index_cast %13 : i32 to index
    %c0_3 = arith.constant 0 : index
    %15 = vector.load %arg3[%14, %c0_3] : memref<256x128xbf16, #tpu.memory_space<vmem>>, vector<256x128xbf16>
    %c0_4 = arith.constant 0 : index
    %c0_5 = arith.constant 0 : index
    %16 = vector.load %arg5[%c0_4, %c0_5] : memref<256x128xf32, #tpu.memory_space<vmem>>, vector<256x128xf32>
    %cst_6 = arith.constant dense<0.000000e+00> : vector<256x128xf32>
    %17 = tpu.matmul %11, %15, %cst_6 {dimension_numbers = #tpu.dot_dimension_numbers<[1], [0], [0], [1], [0, 0, 1, 1], [], []>} : vector<256x256xbf16>, vector<256x128xbf16>, vector<256x128xf32> -> vector<256x128xf32>
    %18 = arith.addf %16, %17 : vector<256x128xf32>
    %c0_7 = arith.constant 0 : index
    %c0_8 = arith.constant 0 : index
    %19 = vector.load %arg5[%c0_7, %c0_8] : memref<256x128xf32, #tpu.memory_space<vmem>>, vector<256x128xf32>
    tpu.vector_store %arg5[%c0_7, %c0_8], %18 {strides = array<i32>} : memref<256x128xf32, #tpu.memory_space<vmem>>, vector<256x128xf32>,
    %c0_i32_9 = arith.constant 0 : i32
    %20 = arith.cmpi eq, %arg1, %c0_i32_9 : i32
    %21 = arith.extui %20 : i1 to i32
    %c0_i32_10 = arith.constant 0 : i32
    %22 = arith.cmpi ne, %21, %c0_i32_10 : i32
    scf.if %22 {
      %c0_11 = arith.constant 0 : index
      %c0_12 = arith.constant 0 : index
      %23 = vector.load %arg5[%c0_11, %c0_12] : memref<256x128xf32, #tpu.memory_space<vmem>>, vector<256x128xf32>
      %c0_13 = arith.constant 0 : index
      %c0_14 = arith.constant 0 : index
      %24 = vector.load %arg4[%c0_13, %c0_14] : memref<1x128xf32, #tpu.memory_space<vmem>>, vector<1x128xf32>
      %25 = vector.broadcast %24 : vector<1x128xf32> to vector<256x128xf32>
      %26 = arith.addf %23, %25 : vector<256x128xf32>
      %cst_15 = arith.constant 0.000000e+00 : f32
      %27 = vector.broadcast %cst_15 : f32 to vector<256x128xf32>
      %28 = arith.maximumf %26, %27 : vector<256x128xf32>
      %c0_16 = arith.constant 0 : index
      %c0_17 = arith.constant 0 : index
      %29 = vector.load %arg5[%c0_16, %c0_17] : memref<256x128xf32, #tpu.memory_space<vmem>>, vector<256x128xf32>
      tpu.vector_store %arg5[%c0_16, %c0_17], %28 {strides = array<i32>} : memref<256x128xf32, #tpu.memory_space<vmem>>, vector<256x128xf32>,
    } else {
    }
    return
  }
  func.func @transform_0(%arg0: i32, %arg1: i32) -> (i32, i32) {
    %c0_i32 = arith.constant 0 : i32
    return %arg0, %arg1 : i32, i32
  }
  func.func @transform_1(%arg0: i32, %arg1: i32) -> (i32, i32) {
    %c0_i32 = arith.constant 0 : i32
    %c0_i32_0 = arith.constant 0 : i32
    %c0_i32_1 = arith.constant 0 : i32
    return %c0_i32, %c0_i32_0 : i32, i32
  }
  func.func @transform_2(%arg0: i32, %arg1: i32) -> (i32, i32) {
    %c0_i32 = arith.constant 0 : i32
    %c0_i32_0 = arith.constant 0 : i32
    %c0_i32_1 = arith.constant 0 : i32
    return %c0_i32, %c0_i32_0 : i32, i32
  }
  func.func @transform_3(%arg0: i32, %arg1: i32) -> (i32, i32) {
    %c0_i32 = arith.constant 0 : i32
    %c0_i32_0 = arith.constant 0 : i32
    return %arg0, %c0_i32 : i32, i32
  }
}

</mosaic_0001>

<llo_original>
// kernel: tpu_custom_call.1
$region0: #{tpu_custom_call.1}
  #allocation0 [shape = 'u32[]', space=smem, size = 0x4, offset = 0x4, fixed_abs, tag = 'smem constant byte address 0x4 - core index']
  #allocation1 [shape = 'u32[144,128]{1,0:T(1,128)}', space=vmem, size = 0x12000, scoped, tag = 'internal scratch']
  %s0 = inlined_call_operand.hbm [shape: f32[200,200], index: 0, kind: input, shape index: {}]
  %s1 = inlined_call_operand.hbm [shape: bf16[256,128], index: 1, kind: input, shape index: {}]
  %s2 = inlined_call_operand.vmem [shape: f32[1,128], index: 2, kind: input, shape index: {}]
  %s3 = inlined_call_operand.hbm [shape: f32[200,128], index: 3, kind: output, shape index: {}]
  %s4 = sld [smem:[#allocation0]]
  $region38: #{tpu_custom_call.1} parent=0
    _
  %s6 = ssub.s32 1, %s4
  %s7 = scalar_select 0, %s6, %s4
  $region1: #{tpu_custom_call.1} parent=0
    #allocation2 [shape = 'u8[262144]{0}', space=vmem, size = 0x40000, scoped, tag = 'input window, operand 0, single buffered']
    #allocation3 [shape = 's32[1]{0}', space=sflag, size = 0x4, scoped, tag = 'scoped memory for tpu_custom_call.1']
    #allocation4 [shape = 's32[1]{0}', space=sflag, size = 0x4, scoped, tag = 'scoped memory for tpu_custom_call.1']
    #allocation5 [shape = 'u8[65536]{0}', space=vmem, size = 0x10000, scoped, tag = 'input window, operand 1, single buffered']
    #allocation6 [shape = 's32[1]{0}', space=sflag, size = 0x4, scoped, tag = 'scoped memory for tpu_custom_call.1']
    #allocation7 [shape = 'u8[131072]{0}', space=vmem, size = 0x20000, scoped, tag = 'output window, operand 0, single buffered']
    %8 = vsyncpa [#allocation3], 0
    %9 = vsyncpa [#allocation6], 0
    %10 = vsyncpa [#allocation4], 0
    // Predicated region
    $region2: #{tpu_custom_call.1} parent=1 // pred_check
      _
    $region3: #{tpu_custom_call.1} parent=1 // pred_check_branch
      %12 = sbr.rel (0) target = $region5
    $region4: #{tpu_custom_call.1} parent=1 // pred_region
      %s14 = ssub.s32 8192, 6400
      %15 = vsyncadd [#allocation3], %s14
      %s16 = sshll.u32 [#allocation2], 4
      %s17 = int_to_ptr.vmem [resolvable:$true] %s16
      %22 = dma.hbm_to_vmem [thread:$0]  %s0, 6400, %s17, [#allocation3], 256, 256, 16
    $region5: #{tpu_custom_call.1} parent=1 // pred_fallthru
      _
    // Predicated region
    $region6: #{tpu_custom_call.1} parent=1 // pred_check
      _
    $region7: #{tpu_custom_call.1} parent=1 // pred_check_branch
      %24 = sbr.rel (0) target = $region9
    $region8: #{tpu_custom_call.1} parent=1 // pred_region
      %s26 = ssub.s32 2048, 2048
      %27 = vsyncadd [#allocation6], %s26
      %s28 = sshll.u32 [#allocation5], 4
      %s29 = int_to_ptr.vmem [resolvable:$true] %s28
      %34 = dma.hbm_to_vmem [thread:$0]  %s1, 2048, %s29, [#allocation6], 64, 64, 4
    $region9: #{tpu_custom_call.1} parent=1 // pred_fallthru
      _
    // Predicated region
    $region10: #{tpu_custom_call.1} parent=1 // pred_check
      _
    $region11: #{tpu_custom_call.1} parent=1 // pred_check_branch
      %36 = sbr.rel (0) target = $region13
    $region12: #{tpu_custom_call.1} parent=1 // pred_region
      _
    $region13: #{tpu_custom_call.1} parent=1 // pred_fallthru
      _
    // Predicated region
    $region14: #{tpu_custom_call.1} parent=1 // pred_check
      _
    $region15: #{tpu_custom_call.1} parent=1 // pred_check_branch
      %38 = sbr.rel (0) target = $region17
    $region16: #{tpu_custom_call.1} parent=1 // pred_region
      %39 = dma.done [#allocation3], 8192
    $region17: #{tpu_custom_call.1} parent=1 // pred_fallthru
      _
    // Predicated region
    $region18: #{tpu_custom_call.1} parent=1 // pred_check
      _
    $region19: #{tpu_custom_call.1} parent=1 // pred_check_branch
      %41 = sbr.rel (0) target = $region21
    $region20: #{tpu_custom_call.1} parent=1 // pred_region
      %42 = dma.done [#allocation6], 2048
    $region21: #{tpu_custom_call.1} parent=1 // pred_fallthru
      _
    %p46 = scmp.eq.s32.totalorder 0, 0
    // Predicated region
    $region22: #{tpu_custom_call.1} parent=1 // pred_check
      %p47 = pneg %p46
    $region23: #{tpu_custom_call.1} parent=1 // pred_check_branch
      %49 = sbr.rel (%p47) target = $region25
    $region24: #{tpu_custom_call.1} parent=1 // pred_region
      %50 = vst [vmem:[#allocation7] sm:$0xff] 0.0
      %51 = vst [vmem:[#allocation7 + $0x8] sm:$0xff] 0.0
      %52 = vst [vmem:[#allocation7 + $0x10] sm:$0xff] 0.0
      %53 = vst [vmem:[#allocation7 + $0x18] sm:$0xff] 0.0
      %54 = vst [vmem:[#allocation7 + $0x20] sm:$0xff] 0.0
      %55 = vst [vmem:[#allocation7 + $0x28] sm:$0xff] 0.0
      %56 = vst [vmem:[#allocation7 + $0x30] sm:$0xff] 0.0
      %57 = vst [vmem:[#allocation7 + $0x38] sm:$0xff] 0.0
      %58 = vst [vmem:[#allocation7 + $0x40] sm:$0xff] 0.0
      %59 = vst [vmem:[#allocation7 + $0x48] sm:$0xff] 0.0
      %60 = vst [vmem:[#allocation7 + $0x50] sm:$0xff] 0.0
      %61 = vst [vmem:[#allocation7 + $0x58] sm:$0xff] 0.0
      %62 = vst [vmem:[#allocation7 + $0x60] sm:$0xff] 0.0
      %63 = vst [vmem:[#allocation7 + $0x68] sm:$0xff] 0.0
      %64 = vst [vmem:[#allocation7 + $0x70] sm:$0xff] 0.0
      %65 = vst [vmem:[#allocation7 + $0x78] sm:$0xff] 0.0
      %66 = vst [vmem:[#allocation7 + $0x80] sm:$0xff] 0.0
      %67 = vst [vmem:[#allocation7 + $0x88] sm:$0xff] 0.0
      %68 = vst [vmem:[#allocation7 + $0x90] sm:$0xff] 0.0
      %69 = vst [vmem:[#allocation7 + $0x98] sm:$0xff] 0.0
      %70 = vst [vmem:[#allocation7 + $0xa0] sm:$0xff] 0.0
      %71 = vst [vmem:[#allocation7 + $0xa8] sm:$0xff] 0.0
      %72 = vst [vmem:[#allocation7 + $0xb0] sm:$0xff] 0.0
      %73 = vst [vmem:[#allocation7 + $0xb8] sm:$0xff] 0.0
      %74 = vst [vmem:[#allocation7 + $0xc0] sm:$0xff] 0.0
      %75 = vst [vmem:[#allocation7 + $0xc8] sm:$0xff] 0.0
      %76 = vst [vmem:[#allocation7 + $0xd0] sm:$0xff] 0.0
      %77 = vst [vmem:[#allocation7 + $0xd8] sm:$0xff] 0.0
      %78 = vst [vmem:[#allocation7 + $0xe0] sm:$0xff] 0.0
      %79 = vst [vmem:[#allocation7 + $0xe8] sm:$0xff] 0.0
      %80 = vst [vmem:[#allocation7 + $0xf0] sm:$0xff] 0.0
      %81 = vst [vmem:[#allocation7 + $0xf8] sm:$0xff] 0.0
    $region25: #{tpu_custom_call.1} parent=1 // pred_fallthru
      _
    %v82 = vld [vmem:[#allocation2] sm:$0xff]
    %v83 = vld [vmem:[#allocation2 + $0x8] sm:$0xff]
    %v84 = vld [vmem:[#allocation2 + $0x10] sm:$0xff]
    %v85 = vld [vmem:[#allocation2 + $0x18] sm:$0xff]
    %v86 = vld [vmem:[#allocation2 + $0x20] sm:$0xff]
    %v87 = vld [vmem:[#allocation2 + $0x28] sm:$0xff]
    %v88 = vld [vmem:[#allocation2 + $0x30] sm:$0xff]
    %v89 = vld [vmem:[#allocation2 + $0x38] sm:$0xff]
    %v90 = vld [vmem:[#allocation2 + $0x40] sm:$0xff]
    %v91 = vld [vmem:[#allocation2 + $0x48] sm:$0xff]
    %v92 = vld [vmem:[#allocation2 + $0x50] sm:$0xff]
    %v93 = vld [vmem:[#allocation2 + $0x58] sm:$0xff]
    %v94 = vld [vmem:[#allocation2 + $0x60] sm:$0xff]
    %v95 = vld [vmem:[#allocation2 + $0x68] sm:$0xff]
    %v96 = vld [vmem:[#allocation2 + $0x70] sm:$0xff]
    %v97 = vld [vmem:[#allocation2 + $0x78] sm:$0xff]
    %v98 = vld [vmem:[#allocation2 + $0x80] sm:$0xff]
    %v99 = vld [vmem:[#allocation2 + $0x88] sm:$0xff]
    %v100 = vld [vmem:[#allocation2 + $0x90] sm:$0xff]
    %v101 = vld [vmem:[#allocation2 + $0x98] sm:$0xff]
    %v102 = vld [vmem:[#allocation2 + $0xa0] sm:$0xff]
    %v103 = vld [vmem:[#allocation2 + $0xa8] sm:$0xff]
    %v104 = vld [vmem:[#allocation2 + $0xb0] sm:$0xff]
    %v105 = vld [vmem:[#allocation2 + $0xb8] sm:$0xff]
    %v106 = vld [vmem:[#allocation2 + $0xc0] sm:$0xff]
    %v107 = vld [vmem:[#allocation2 + $0xc8] sm:$0xff]
    %v108 = vld [vmem:[#allocation2 + $0xd0] sm:$0xff]
    %v109 = vld [vmem:[#allocation2 + $0xd8] sm:$0xff]
    %v110 = vld [vmem:[#allocation2 + $0xe0] sm:$0xff]
    %v111 = vld [vmem:[#allocation2 + $0xe8] sm:$0xff]
    %v112 = vld [vmem:[#allocation2 + $0xf0] sm:$0xff]
    %v113 = vld [vmem:[#allocation2 + $0xf8] sm:$0xff]
    %v114 = vld [vmem:[#allocation2 + $0x100] sm:$0xff]
    %v115 = vld [vmem:[#allocation2 + $0x108] sm:$0xff]
    %v116 = vld [vmem:[#allocation2 + $0x110] sm:$0xff]
    %v117 = vld [vmem:[#allocation2 + $0x118] sm:$0xff]
    %v118 = vld [vmem:[#allocation2 + $0x120] sm:$0xff]
    %v119 = vld [vmem:[#allocation2 + $0x128] sm:$0xff]
    %v120 = vld [vmem:[#allocation2 + $0x130] sm:$0xff]
    %v121 = vld [vmem:[#allocation2 + $0x138] sm:$0xff]
    %v122 = vld [vmem:[#allocation2 + $0x140] sm:$0xff]
    %v123 = vld [vmem:[#allocation2 + $0x148] sm:$0xff]
    %v124 = vld [vmem:[#allocation2 + $0x150] sm:$0xff]
    %v125 = vld [vmem:[#allocation2 + $0x158] sm:$0xff]
    %v126 = vld [vmem:[#allocation2 + $0x160] sm:$0xff]
    %v127 = vld [vmem:[#allocation2 + $0x168] sm:$0xff]
    %v128 = vld [vmem:[#allocation2 + $0x170] sm:$0xff]
    %v129 = vld [vmem:[#allocation2 + $0x178] sm:$0xff]
    %v130 = vld [vmem:[#allocation2 + $0x180] sm:$0xff]
    %v131 = vld [vmem:[#allocation2 + $0x188] sm:$0xff]
    %v132 = vld [vmem:[#allocation2 + $0x190] sm:$0xff]
    %v133 = vld [vmem:[#allocation2 + $0x198] sm:$0xff]
    %v134 = vld [vmem:[#allocation2 + $0x1a0] sm:$0xff]
    %v135 = vld [vmem:[#allocation2 + $0x1a8] sm:$0xff]
    %v136 = vld [vmem:[#allocation2 + $0x1b0] sm:$0xff]
    %v137 = vld [vmem:[#allocation2 + $0x1b8] sm:$0xff]
    %v138 = vld [vmem:[#allocation2 + $0x1c0] sm:$0xff]
    %v139 = vld [vmem:[#allocation2 + $0x1c8] sm:$0xff]
    %v140 = vld [vmem:[#allocation2 + $0x1d0] sm:$0xff]
    %v141 = vld [vmem:[#allocation2 + $0x1d8] sm:$0xff]
    %v142 = vld [vmem:[#allocation2 + $0x1e0] sm:$0xff]
    %v143 = vld [vmem:[#allocation2 + $0x1e8] sm:$0xff]
    %v144 = vld [vmem:[#allocation2 + $0x1f0] sm:$0xff]
    %v145 = vld [vmem:[#allocation2 + $0x1f8] sm:$0xff]
    %v146 = vpack.c.bf16 %v84, %v82
    %v147 = vpack.c.bf16 %v85, %v83
    %v148 = vpack.c.bf16 %v88, %v86
    %v149 = vpack.c.bf16 %v89, %v87
    %v150 = vpack.c.bf16 %v92, %v90
    %v151 = vpack.c.bf16 %v93, %v91
    %v152 = vpack.c.bf16 %v96, %v94
    %v153 = vpack.c.bf16 %v97, %v95
    %v154 = vpack.c.bf16 %v100, %v98
    %v155 = vpack.c.bf16 %v101, %v99
    %v156 = vpack.c.bf16 %v104, %v102
    %v157 = vpack.c.bf16 %v105, %v103
    %v158 = vpack.c.bf16 %v108, %v106
    %v159 = vpack.c.bf16 %v109, %v107
    %v160 = vpack.c.bf16 %v112, %v110
    %v161 = vpack.c.bf16 %v113, %v111
    %v162 = vpack.c.bf16 %v116, %v114
    %v163 = vpack.c.bf16 %v117, %v115
    %v164 = vpack.c.bf16 %v120, %v118
    %v165 = vpack.c.bf16 %v121, %v119
    %v166 = vpack.c.bf16 %v124, %v122
    %v167 = vpack.c.bf16 %v125, %v123
    %v168 = vpack.c.bf16 %v128, %v126
    %v169 = vpack.c.bf16 %v129, %v127
    %v170 = vpack.c.bf16 %v132, %v130
    %v171 = vpack.c.bf16 %v133, %v131
    %v172 = vpack.c.bf16 %v136, %v134
    %v173 = vpack.c.bf16 %v137, %v135
    %v174 = vpack.c.bf16 %v140, %v138
    %v175 = vpack.c.bf16 %v141, %v139
    %v176 = vpack.c.bf16 %v144, %v142
    %v177 = vpack.c.bf16 %v145, %v143
    %v178 = vlaneseq
    %v179 = vand.u32 %v178, 127
    %v180 = vadd.s32 %v179, 128
    %s181 = smul.u32 0, 256
    %s182 = ssub.s32 200, %s181
    %v183 = vstv %s182
    %vm184 = vcmp.lt.s32.totalorder %v179, %v183
    %vm185 = vcmp.lt.s32.totalorder %v180, %v183
    %vm186 = vmpackc.low %vm185, %vm184
    %v187 = vsel %vm186, 65537, 0
    %v188 = vlaneseq
    %v189 = vshrl.u32 %v188, 7
    %v190 = vsub.s32 0, %v189
    %v191 = vrot.slane %v187, %v190
    %v192 = vlaneseq
    %v193 = vshrl.u32 %v192, 7
    %v194 = vsub.s32 4, %v193
    %v195 = vrot.slane %v187, %v194
    %vm196 = vcmp.ne.s16.totalorder %v191, 0
    %vm197 = vcmp.ne.s16.totalorder %v195, 0
    %v198 = vsel %vm196, %v146, 0
    %v199 = vsel %vm197, %v147, 0
    %v200 = vsel %vm196, %v148, 0
    %v201 = vsel %vm197, %v149, 0
    %v202 = vsel %vm196, %v150, 0
    %v203 = vsel %vm197, %v151, 0
    %v204 = vsel %vm196, %v152, 0
    %v205 = vsel %vm197, %v153, 0
    %v206 = vsel %vm196, %v154, 0
    %v207 = vsel %vm197, %v155, 0
    %v208 = vsel %vm196, %v156, 0
    %v209 = vsel %vm197, %v157, 0
    %v210 = vsel %vm196, %v158, 0
    %v211 = vsel %vm197, %v159, 0
    %v212 = vsel %vm196, %v160, 0
    %v213 = vsel %vm197, %v161, 0
    %v214 = vsel %vm196, %v162, 0
    %v215 = vsel %vm197, %v163, 0
    %v216 = vsel %vm196, %v164, 0
    %v217 = vsel %vm197, %v165, 0
    %v218 = vsel %vm196, %v166, 0
    %v219 = vsel %vm197, %v167, 0
    %v220 = vsel %vm196, %v168, 0
    %v221 = vsel %vm197, %v169, 0
    %v222 = vsel %vm196, %v170, 0
    %v223 = vsel %vm197, %v171, 0
    %v224 = vsel %vm196, %v172, 0
    %v225 = vsel %vm197, %v173, 0
    %v226 = vsel %vm196, %v174, 0
    %v227 = vsel %vm197, %v175, 0
    %v228 = vsel %vm196, %v176, 0
    %v229 = vsel %vm197, %v177, 0
    %s230 = sshra.s32 %s181, 3
    %s231 = sand.u32 %s181, 7
    %s232 = smul.addr %s230, 4
    %s233 = scalar_lea.vmem [#allocation5], %s232
    %v234 = vld [vmem:[%s233] sm:$0xf]
    %v235 = vld [vmem:[%s233 + $0x4] sm:$0xf]
    %v236 = vld [vmem:[%s233 + $0x8] sm:$0xf]
    %v237 = vld [vmem:[%s233 + $0xc] sm:$0xf]
    %v238 = vld [vmem:[%s233 + $0x10] sm:$0xf]
    %v239 = vld [vmem:[%s233 + $0x14] sm:$0xf]
    %v240 = vld [vmem:[%s233 + $0x18] sm:$0xf]
    %v241 = vld [vmem:[%s233 + $0x1c] sm:$0xf]
    %v242 = vld [vmem:[%s233 + $0x20] sm:$0xf]
    %v243 = vld [vmem:[%s233 + $0x24] sm:$0xf]
    %v244 = vld [vmem:[%s233 + $0x28] sm:$0xf]
    %v245 = vld [vmem:[%s233 + $0x2c] sm:$0xf]
    %v246 = vld [vmem:[%s233 + $0x30] sm:$0xf]
    %v247 = vld [vmem:[%s233 + $0x34] sm:$0xf]
    %v248 = vld [vmem:[%s233 + $0x38] sm:$0xf]
    %v249 = vld [vmem:[%s233 + $0x3c] sm:$0xf]
    %v250 = vld [vmem:[%s233 + $0x40] sm:$0xf]
    %v251 = vld [vmem:[%s233 + $0x44] sm:$0xf]
    %v252 = vld [vmem:[%s233 + $0x48] sm:$0xf]
    %v253 = vld [vmem:[%s233 + $0x4c] sm:$0xf]
    %v254 = vld [vmem:[%s233 + $0x50] sm:$0xf]
    %v255 = vld [vmem:[%s233 + $0x54] sm:$0xf]
    %v256 = vld [vmem:[%s233 + $0x58] sm:$0xf]
    %v257 = vld [vmem:[%s233 + $0x5c] sm:$0xf]
    %v258 = vld [vmem:[%s233 + $0x60] sm:$0xf]
    %v259 = vld [vmem:[%s233 + $0x64] sm:$0xf]
    %v260 = vld [vmem:[%s233 + $0x68] sm:$0xf]
    %v261 = vld [vmem:[%s233 + $0x6c] sm:$0xf]
    %v262 = vld [vmem:[%s233 + $0x70] sm:$0xf]
    %v263 = vld [vmem:[%s233 + $0x74] sm:$0xf]
    %v264 = vld [vmem:[%s233 + $0x78] sm:$0xf]
    %v265 = vld [vmem:[%s233 + $0x7c] sm:$0xf]
    %v266 = vld [vmem:[#allocation7] sm:$0xff]
    %v267 = vld [vmem:[#allocation7 + $0x8] sm:$0xff]
    %v268 = vld [vmem:[#allocation7 + $0x10] sm:$0xff]
    %v269 = vld [vmem:[#allocation7 + $0x18] sm:$0xff]
    %v270 = vld [vmem:[#allocation7 + $0x20] sm:$0xff]
    %v271 = vld [vmem:[#allocation7 + $0x28] sm:$0xff]
    %v272 = vld [vmem:[#allocation7 + $0x30] sm:$0xff]
    %v273 = vld [vmem:[#allocation7 + $0x38] sm:$0xff]
    %v274 = vld [vmem:[#allocation7 + $0x40] sm:$0xff]
    %v275 = vld [vmem:[#allocation7 + $0x48] sm:$0xff]
    %v276 = vld [vmem:[#allocation7 + $0x50] sm:$0xff]
    %v277 = vld [vmem:[#allocation7 + $0x58] sm:$0xff]
    %v278 = vld [vmem:[#allocation7 + $0x60] sm:$0xff]
    %v279 = vld [vmem:[#allocation7 + $0x68] sm:$0xff]
    %v280 = vld [vmem:[#allocation7 + $0x70] sm:$0xff]
    %v281 = vld [vmem:[#allocation7 + $0x78] sm:$0xff]
    %v282 = vld [vmem:[#allocation7 + $0x80] sm:$0xff]
    %v283 = vld [vmem:[#allocation7 + $0x88] sm:$0xff]
    %v284 = vld [vmem:[#allocation7 + $0x90] sm:$0xff]
    %v285 = vld [vmem:[#allocation7 + $0x98] sm:$0xff]
    %v286 = vld [vmem:[#allocation7 + $0xa0] sm:$0xff]
    %v287 = vld [vmem:[#allocation7 + $0xa8] sm:$0xff]
    %v288 = vld [vmem:[#allocation7 + $0xb0] sm:$0xff]
    %v289 = vld [vmem:[#allocation7 + $0xb8] sm:$0xff]
    %v290 = vld [vmem:[#allocation7 + $0xc0] sm:$0xff]
    %v291 = vld [vmem:[#allocation7 + $0xc8] sm:$0xff]
    %v292 = vld [vmem:[#allocation7 + $0xd0] sm:$0xff]
    %v293 = vld [vmem:[#allocation7 + $0xd8] sm:$0xff]
    %v294 = vld [vmem:[#allocation7 + $0xe0] sm:$0xff]
    %v295 = vld [vmem:[#allocation7 + $0xe8] sm:$0xff]
    %v296 = vld [vmem:[#allocation7 + $0xf0] sm:$0xff]
    %v297 = vld [vmem:[#allocation7 + $0xf8] sm:$0xff]
    %v330 = vunpack.c.l.b16 %v234
    %v331 = vunpack.c.l.b16 %v235
    %v332 = vunpack.c.l.b16 %v236
    %v333 = vunpack.c.l.b16 %v237
    %v334 = vunpack.c.l.b16 %v238
    %v335 = vunpack.c.l.b16 %v239
    %v336 = vunpack.c.l.b16 %v240
    %v337 = vunpack.c.l.b16 %v241
    %v338 = vunpack.c.l.b16 %v242
    %v339 = vunpack.c.l.b16 %v243
    %v340 = vunpack.c.l.b16 %v244
    %v341 = vunpack.c.l.b16 %v245
    %v342 = vunpack.c.l.b16 %v246
    %v343 = vunpack.c.l.b16 %v247
    %v344 = vunpack.c.l.b16 %v248
    %v345 = vunpack.c.l.b16 %v249
    %v346 = vunpack.c.l.b16 %v250
    %v347 = vunpack.c.l.b16 %v251
    %v348 = vunpack.c.l.b16 %v252
    %v349 = vunpack.c.l.b16 %v253
    %v350 = vunpack.c.l.b16 %v254
    %v351 = vunpack.c.l.b16 %v255
    %v352 = vunpack.c.l.b16 %v256
    %v353 = vunpack.c.l.b16 %v257
    %v354 = vunpack.c.l.b16 %v258
    %v355 = vunpack.c.l.b16 %v259
    %v356 = vunpack.c.l.b16 %v260
    %v357 = vunpack.c.l.b16 %v261
    %v358 = vunpack.c.l.b16 %v262
    %v359 = vunpack.c.l.b16 %v263
    %v360 = vunpack.c.l.b16 %v264
    %v361 = vunpack.c.l.b16 %v265
    %v362 = vpack.c.b16 %v331, %v330
    %v363 = vpack.c.b16 %v333, %v332
    %v364 = vpack.c.b16 %v335, %v334
    %v365 = vpack.c.b16 %v337, %v336
    %v366 = vpack.c.b16 %v339, %v338
    %v367 = vpack.c.b16 %v341, %v340
    %v368 = vpack.c.b16 %v343, %v342
    %v369 = vpack.c.b16 %v345, %v344
    %v370 = vpack.c.b16 %v347, %v346
    %v371 = vpack.c.b16 %v349, %v348
    %v372 = vpack.c.b16 %v351, %v350
    %v373 = vpack.c.b16 %v353, %v352
    %v374 = vpack.c.b16 %v355, %v354
    %v375 = vpack.c.b16 %v357, %v356
    %v376 = vpack.c.b16 %v359, %v358
    %v377 = vpack.c.b16 %v361, %v360
    %394 = vmatprep.subr.bf16.mxu0 0
    %395 = vmatpush1.bf16.msra.mxu0 %v362
    %396 = vmatprep.subr.bf16.mxu0 0
    %397 = vmatpush1.bf16.msra.mxu0 %v363
    %398 = vmatprep.subr.bf16.mxu0 0
    %399 = vmatpush1.bf16.msra.mxu0 %v364
    %400 = vmatprep.subr.bf16.mxu0 0
    %401 = vmatpush1.bf16.msra.mxu0 %v365
    %402 = vmatprep.subr.bf16.mxu0 0
    %403 = vmatpush1.bf16.msra.mxu0 %v366
    %404 = vmatprep.subr.bf16.mxu0 0
    %405 = vmatpush1.bf16.msra.mxu0 %v367
    %406 = vmatprep.subr.bf16.mxu0 0
    %407 = vmatpush1.bf16.msra.mxu0 %v368
    %408 = vmatprep.subr.bf16.mxu0 0
    %409 = vmatpush1.bf16.msra.mxu0 %v369
    %410 = vmatprep.subr.bf16.mxu0 0
    %411 = vmatpush1.bf16.msra.mxu0 %v370
    %412 = vmatprep.subr.bf16.mxu0 0
    %413 = vmatpush1.bf16.msra.mxu0 %v371
    %414 = vmatprep.subr.bf16.mxu0 0
    %415 = vmatpush1.bf16.msra.mxu0 %v372
    %416 = vmatprep.subr.bf16.mxu0 0
    %417 = vmatpush1.bf16.msra.mxu0 %v373
    %418 = vmatprep.subr.bf16.mxu0 0
    %419 = vmatpush1.bf16.msra.mxu0 %v374
    %420 = vmatprep.subr.bf16.mxu0 0
    %421 = vmatpush1.bf16.msra.mxu0 %v375
    %422 = vmatprep.subr.bf16.mxu0 0
    %423 = vmatpush1.bf16.msra.mxu0 %v376
    %424 = vmatprep.subr.bf16.mxu0 0
    %425 = vmatpush1.bf16.msra.mxu0 %v377
    %426 = vmatprep.mubr.bf16.mxu0 %v199
    %427 = vmatmul.mubr.bf16.gmra.mrb[0].mxu0 %v198
    %v428 = vpop.f32.mrb[0].mxu0
    %v429 = vadd.f32 0.0, %v428
    %v430 = vpop.f32.mrb[0].mxu0
    %v431 = vpop.f32.mrb[0].mxu0
    %v432 = vadd.f32 0.0, %v431
    %v433 = vpop.f32.mrb[0].mxu0
    %434 = vmatprep.mubr.bf16.mxu0 %v201
    %435 = vmatmul.mubr.bf16.gmra.mrb[0].mxu0 %v200
    %v436 = vpop.f32.mrb[0].mxu0
    %v437 = vadd.f32 0.0, %v436
    %v438 = vpop.f32.mrb[0].mxu0
    %v439 = vpop.f32.mrb[0].mxu0
    %v440 = vadd.f32 0.0, %v439
    %v441 = vpop.f32.mrb[0].mxu0
    %442 = vmatprep.mubr.bf16.mxu0 %v203
    %443 = vmatmul.mubr.bf16.gmra.mrb[0].mxu0 %v202
    %v444 = vpop.f32.mrb[0].mxu0
    %v445 = vadd.f32 0.0, %v444
    %v446 = vpop.f32.mrb[0].mxu0
    %v447 = vpop.f32.mrb[0].mxu0
    %v448 = vadd.f32 0.0, %v447
    %v449 = vpop.f32.mrb[0].mxu0
    %450 = vmatprep.mubr.bf16.mxu0 %v205
    %451 = vmatmul.mubr.bf16.gmra.mrb[0].mxu0 %v204
    %v452 = vpop.f32.mrb[0].mxu0
    %v453 = vadd.f32 0.0, %v452
    %v454 = vpop.f32.mrb[0].mxu0
    %v455 = vpop.f32.mrb[0].mxu0
    %v456 = vadd.f32 0.0, %v455
    %v457 = vpop.f32.mrb[0].mxu0
    %458 = vmatprep.mubr.bf16.mxu0 %v207
    %459 = vmatmul.mubr.bf16.gmra.mrb[0].mxu0 %v206
    %v460 = vpop.f32.mrb[0].mxu0
    %v461 = vadd.f32 0.0, %v460
    %v462 = vpop.f32.mrb[0].mxu0
    %v463 = vpop.f32.mrb[0].mxu0
    %v464 = vadd.f32 0.0, %v463
    %v465 = vpop.f32.mrb[0].mxu0
    %466 = vmatprep.mubr.bf16.mxu0 %v209
    %467 = vmatmul.mubr.bf16.gmra.mrb[0].mxu0 %v208
    %v468 = vpop.f32.mrb[0].mxu0
    %v469 = vadd.f32 0.0, %v468
    %v470 = vpop.f32.mrb[0].mxu0
    %v471 = vpop.f32.mrb[0].mxu0
    %v472 = vadd.f32 0.0, %v471
    %v473 = vpop.f32.mrb[0].mxu0
    %474 = vmatprep.mubr.bf16.mxu0 %v211
    %475 = vmatmul.mubr.bf16.gmra.mrb[0].mxu0 %v210
    %v476 = vpop.f32.mrb[0].mxu0
    %v477 = vadd.f32 0.0, %v476
    %v478 = vpop.f32.mrb[0].mxu0
    %v479 = vpop.f32.mrb[0].mxu0
    %v480 = vadd.f32 0.0, %v479
    %v481 = vpop.f32.mrb[0].mxu0
    %482 = vmatprep.mubr.bf16.mxu0 %v213
    %483 = vmatmul.mubr.bf16.gmra.mrb[0].mxu0 %v212
    %v484 = vpop.f32.mrb[0].mxu0
    %v485 = vadd.f32 0.0, %v484
    %v486 = vpop.f32.mrb[0].mxu0
    %v487 = vpop.f32.mrb[0].mxu0
    %v488 = vadd.f32 0.0, %v487
    %v489 = vpop.f32.mrb[0].mxu0
    %490 = vmatprep.mubr.bf16.mxu0 %v215
    %491 = vmatmul.mubr.bf16.gmra.mrb[0].mxu0 %v214
    %v492 = vpop.f32.mrb[0].mxu0
    %v493 = vadd.f32 0.0, %v492
    %v494 = vpop.f32.mrb[0].mxu0
    %v495 = vpop.f32.mrb[0].mxu0
    %v496 = vadd.f32 0.0, %v495
    %v497 = vpop.f32.mrb[0].mxu0
    %498 = vmatprep.mubr.bf16.mxu0 %v217
    %499 = vmatmul.mubr.bf16.gmra.mrb[0].mxu0 %v216
    %v500 = vpop.f32.mrb[0].mxu0
    %v501 = vadd.f32 0.0, %v500
    %v502 = vpop.f32.mrb[0].mxu0
    %v503 = vpop.f32.mrb[0].mxu0
    %v504 = vadd.f32 0.0, %v503
    %v505 = vpop.f32.mrb[0].mxu0
    %506 = vmatprep.mubr.bf16.mxu0 %v219
    %507 = vmatmul.mubr.bf16.gmra.mrb[0].mxu0 %v218
    %v508 = vpop.f32.mrb[0].mxu0
    %v509 = vadd.f32 0.0, %v508
    %v510 = vpop.f32.mrb[0].mxu0
    %v511 = vpop.f32.mrb[0].mxu0
    %v512 = vadd.f32 0.0, %v511
    %v513 = vpop.f32.mrb[0].mxu0
    %514 = vmatprep.mubr.bf16.mxu0 %v221
    %515 = vmatmul.mubr.bf16.gmra.mrb[0].mxu0 %v220
    %v516 = vpop.f32.mrb[0].mxu0
    %v517 = vadd.f32 0.0, %v516
    %v518 = vpop.f32.mrb[0].mxu0
    %v519 = vpop.f32.mrb[0].mxu0
    %v520 = vadd.f32 0.0, %v519
    %v521 = vpop.f32.mrb[0].mxu0
    %522 = vmatprep.mubr.bf16.mxu0 %v223
    %523 = vmatmul.mubr.bf16.gmra.mrb[0].mxu0 %v222
    %v524 = vpop.f32.mrb[0].mxu0
    %v525 = vadd.f32 0.0, %v524
    %v526 = vpop.f32.mrb[0].mxu0
    %v527 = vpop.f32.mrb[0].mxu0
    %v528 = vadd.f32 0.0, %v527
    %v529 = vpop.f32.mrb[0].mxu0
    %530 = vmatprep.mubr.bf16.mxu0 %v225
    %531 = vmatmul.mubr.bf16.gmra.mrb[0].mxu0 %v224
    %v532 = vpop.f32.mrb[0].mxu0
    %v533 = vadd.f32 0.0, %v532
    %v534 = vpop.f32.mrb[0].mxu0
    %v535 = vpop.f32.mrb[0].mxu0
    %v536 = vadd.f32 0.0, %v535
    %v537 = vpop.f32.mrb[0].mxu0
    %538 = vmatprep.mubr.bf16.mxu0 %v227
    %539 = vmatmul.mubr.bf16.gmra.mrb[0].mxu0 %v226
    %v540 = vpop.f32.mrb[0].mxu0
    %v541 = vadd.f32 0.0, %v540
    %v542 = vpop.f32.mrb[0].mxu0
    %v543 = vpop.f32.mrb[0].mxu0
    %v544 = vadd.f32 0.0, %v543
    %v545 = vpop.f32.mrb[0].mxu0
    %546 = vmatprep.mubr.bf16.mxu0 %v229
    %547 = vmatmul.mubr.bf16.gmra.mrb[0].mxu0 %v228
    %v548 = vpop.f32.mrb[0].mxu0
    %v549 = vadd.f32 0.0, %v548
    %v550 = vpop.f32.mrb[0].mxu0
    %v551 = vpop.f32.mrb[0].mxu0
    %v552 = vadd.f32 0.0, %v551
    %v553 = vpop.f32.mrb[0].mxu0
    %554 = vdwg.mxu0
    %v555 = vadd.f32 %v266, %v429
    %v556 = vadd.f32 %v267, %v432
    %v557 = vadd.f32 %v268, %v437
    %v558 = vadd.f32 %v269, %v440
    %v559 = vadd.f32 %v270, %v445
    %v560 = vadd.f32 %v271, %v448
    %v561 = vadd.f32 %v272, %v453
    %v562 = vadd.f32 %v273, %v456
    %v563 = vadd.f32 %v274, %v461
    %v564 = vadd.f32 %v275, %v464
    %v565 = vadd.f32 %v276, %v469
    %v566 = vadd.f32 %v277, %v472
    %v567 = vadd.f32 %v278, %v477
    %v568 = vadd.f32 %v279, %v480
    %v569 = vadd.f32 %v280, %v485
    %v570 = vadd.f32 %v281, %v488
    %v571 = vadd.f32 %v282, %v493
    %v572 = vadd.f32 %v283, %v496
    %v573 = vadd.f32 %v284, %v501
    %v574 = vadd.f32 %v285, %v504
    %v575 = vadd.f32 %v286, %v509
    %v576 = vadd.f32 %v287, %v512
    %v577 = vadd.f32 %v288, %v517
    %v578 = vadd.f32 %v289, %v520
    %v579 = vadd.f32 %v290, %v525
    %v580 = vadd.f32 %v291, %v528
    %v581 = vadd.f32 %v292, %v533
    %v582 = vadd.f32 %v293, %v536
    %v583 = vadd.f32 %v294, %v541
    %v584 = vadd.f32 %v295, %v544
    %v585 = vadd.f32 %v296, %v549
    %v586 = vadd.f32 %v297, %v552
    %587 = vst [vmem:[#allocation7] sm:$0xff] %v555
    %588 = vst [vmem:[#allocation7 + $0x8] sm:$0xff] %v556
    %589 = vst [vmem:[#allocation7 + $0x10] sm:$0xff] %v557
    %590 = vst [vmem:[#allocation7 + $0x18] sm:$0xff] %v558
    %591 = vst [vmem:[#allocation7 + $0x20] sm:$0xff] %v559
    %592 = vst [vmem:[#allocation7 + $0x28] sm:$0xff] %v560
    %593 = vst [vmem:[#allocation7 + $0x30] sm:$0xff] %v561
    %594 = vst [vmem:[#allocation7 + $0x38] sm:$0xff] %v562
    %595 = vst [vmem:[#allocation7 + $0x40] sm:$0xff] %v563
    %596 = vst [vmem:[#allocation7 + $0x48] sm:$0xff] %v564
    %597 = vst [vmem:[#allocation7 + $0x50] sm:$0xff] %v565
    %598 = vst [vmem:[#allocation7 + $0x58] sm:$0xff] %v566
    %599 = vst [vmem:[#allocation7 + $0x60] sm:$0xff] %v567
    %600 = vst [vmem:[#allocation7 + $0x68] sm:$0xff] %v568
    %601 = vst [vmem:[#allocation7 + $0x70] sm:$0xff] %v569
    %602 = vst [vmem:[#allocation7 + $0x78] sm:$0xff] %v570
    %603 = vst [vmem:[#allocation7 + $0x80] sm:$0xff] %v571
    %604 = vst [vmem:[#allocation7 + $0x88] sm:$0xff] %v572
    %605 = vst [vmem:[#allocation7 + $0x90] sm:$0xff] %v573
    %606 = vst [vmem:[#allocation7 + $0x98] sm:$0xff] %v574
    %607 = vst [vmem:[#allocation7 + $0xa0] sm:$0xff] %v575
    %608 = vst [vmem:[#allocation7 + $0xa8] sm:$0xff] %v576
    %609 = vst [vmem:[#allocation7 + $0xb0] sm:$0xff] %v577
    %610 = vst [vmem:[#allocation7 + $0xb8] sm:$0xff] %v578
    %611 = vst [vmem:[#allocation7 + $0xc0] sm:$0xff] %v579
    %612 = vst [vmem:[#allocation7 + $0xc8] sm:$0xff] %v580
    %613 = vst [vmem:[#allocation7 + $0xd0] sm:$0xff] %v581
    %614 = vst [vmem:[#allocation7 + $0xd8] sm:$0xff] %v582
    %615 = vst [vmem:[#allocation7 + $0xe0] sm:$0xff] %v583
    %616 = vst [vmem:[#allocation7 + $0xe8] sm:$0xff] %v584
    %617 = vst [vmem:[#allocation7 + $0xf0] sm:$0xff] %v585
    %618 = vst [vmem:[#allocation7 + $0xf8] sm:$0xff] %v586
    // Predicated region
    $region26: #{tpu_custom_call.1} parent=1 // pred_check
      %p619 = pneg %p46
    $region27: #{tpu_custom_call.1} parent=1 // pred_check_branch
      %621 = sbr.rel (%p619) target = $region29
    $region28: #{tpu_custom_call.1} parent=1 // pred_region
      %v622 = vld [vmem:[#allocation7] sm:$0xff]
      %v623 = vld [vmem:[#allocation7 + $0x8] sm:$0xff]
      %v624 = vld [vmem:[#allocation7 + $0x10] sm:$0xff]
      %v625 = vld [vmem:[#allocation7 + $0x18] sm:$0xff]
      %v626 = vld [vmem:[#allocation7 + $0x20] sm:$0xff]
      %v627 = vld [vmem:[#allocation7 + $0x28] sm:$0xff]
      %v628 = vld [vmem:[#allocation7 + $0x30] sm:$0xff]
      %v629 = vld [vmem:[#allocation7 + $0x38] sm:$0xff]
      %v630 = vld [vmem:[#allocation7 + $0x40] sm:$0xff]
      %v631 = vld [vmem:[#allocation7 + $0x48] sm:$0xff]
      %v632 = vld [vmem:[#allocation7 + $0x50] sm:$0xff]
      %v633 = vld [vmem:[#allocation7 + $0x58] sm:$0xff]
      %v634 = vld [vmem:[#allocation7 + $0x60] sm:$0xff]
      %v635 = vld [vmem:[#allocation7 + $0x68] sm:$0xff]
      %v636 = vld [vmem:[#allocation7 + $0x70] sm:$0xff]
      %v637 = vld [vmem:[#allocation7 + $0x78] sm:$0xff]
      %v638 = vld [vmem:[#allocation7 + $0x80] sm:$0xff]
      %v639 = vld [vmem:[#allocation7 + $0x88] sm:$0xff]
      %v640 = vld [vmem:[#allocation7 + $0x90] sm:$0xff]
      %v641 = vld [vmem:[#allocation7 + $0x98] sm:$0xff]
      %v642 = vld [vmem:[#allocation7 + $0xa0] sm:$0xff]
      %v643 = vld [vmem:[#allocation7 + $0xa8] sm:$0xff]
      %v644 = vld [vmem:[#allocation7 + $0xb0] sm:$0xff]
      %v645 = vld [vmem:[#allocation7 + $0xb8] sm:$0xff]
      %v646 = vld [vmem:[#allocation7 + $0xc0] sm:$0xff]
      %v647 = vld [vmem:[#allocation7 + $0xc8] sm:$0xff]
      %v648 = vld [vmem:[#allocation7 + $0xd0] sm:$0xff]
      %v649 = vld [vmem:[#allocation7 + $0xd8] sm:$0xff]
      %v650 = vld [vmem:[#allocation7 + $0xe0] sm:$0xff]
      %v651 = vld [vmem:[#allocation7 + $0xe8] sm:$0xff]
      %v652 = vld [vmem:[#allocation7 + $0xf0] sm:$0xff]
      %v653 = vld [vmem:[#allocation7 + $0xf8] sm:$0xff]
      %v654 = vld [vmem:[%s2] sm:$0x1]
      %v656 = vlaneseq
      %v657 = vshrl.u32 %v656, 7
      %v658 = vsub.s32 0, %v657
      %v659 = vrot.slane %v654, %v658
      %v661 = vadd.f32 %v622, %v659
      %v662 = vadd.f32 %v623, %v659
      %v663 = vadd.f32 %v624, %v659
      %v664 = vadd.f32 %v625, %v659
      %v665 = vadd.f32 %v626, %v659
      %v666 = vadd.f32 %v627, %v659
      %v667 = vadd.f32 %v628, %v659
      %v668 = vadd.f32 %v629, %v659
      %v669 = vadd.f32 %v630, %v659
      %v670 = vadd.f32 %v631, %v659
      %v671 = vadd.f32 %v632, %v659
      %v672 = vadd.f32 %v633, %v659
      %v673 = vadd.f32 %v634, %v659
      %v674 = vadd.f32 %v635, %v659
      %v675 = vadd.f32 %v636, %v659
      %v676 = vadd.f32 %v637, %v659
      %v677 = vadd.f32 %v638, %v659
      %v678 = vadd.f32 %v639, %v659
      %v679 = vadd.f32 %v640, %v659
      %v680 = vadd.f32 %v641, %v659
      %v681 = vadd.f32 %v642, %v659
      %v682 = vadd.f32 %v643, %v659
      %v683 = vadd.f32 %v644, %v659
      %v684 = vadd.f32 %v645, %v659
      %v685 = vadd.f32 %v646, %v659
      %v686 = vadd.f32 %v647, %v659
      %v687 = vadd.f32 %v648, %v659
      %v688 = vadd.f32 %v649, %v659
      %v689 = vadd.f32 %v650, %v659
      %v690 = vadd.f32 %v651, %v659
      %v691 = vadd.f32 %v652, %v659
      %v692 = vadd.f32 %v653, %v659
      %v693 = vmax.f32 %v661, 0.0
      %v694 = vmax.f32 %v662, 0.0
      %v695 = vmax.f32 %v663, 0.0
      %v696 = vmax.f32 %v664, 0.0
      %v697 = vmax.f32 %v665, 0.0
      %v698 = vmax.f32 %v666, 0.0
      %v699 = vmax.f32 %v667, 0.0
      %v700 = vmax.f32 %v668, 0.0
      %v701 = vmax.f32 %v669, 0.0
      %v702 = vmax.f32 %v670, 0.0
      %v703 = vmax.f32 %v671, 0.0
      %v704 = vmax.f32 %v672, 0.0
      %v705 = vmax.f32 %v673, 0.0
      %v706 = vmax.f32 %v674, 0.0
      %v707 = vmax.f32 %v675, 0.0
      %v708 = vmax.f32 %v676, 0.0
      %v709 = vmax.f32 %v677, 0.0
      %v710 = vmax.f32 %v678, 0.0
      %v711 = vmax.f32 %v679, 0.0
      %v712 = vmax.f32 %v680, 0.0
      %v713 = vmax.f32 %v681, 0.0
      %v714 = vmax.f32 %v682, 0.0
      %v715 = vmax.f32 %v683, 0.0
      %v716 = vmax.f32 %v684, 0.0
      %v717 = vmax.f32 %v685, 0.0
      %v718 = vmax.f32 %v686, 0.0
      %v719 = vmax.f32 %v687, 0.0
      %v720 = vmax.f32 %v688, 0.0
      %v721 = vmax.f32 %v689, 0.0
      %v722 = vmax.f32 %v690, 0.0
      %v723 = vmax.f32 %v691, 0.0
      %v724 = vmax.f32 %v692, 0.0
      %725 = vst [vmem:[#allocation7] sm:$0xff] %v693
      %726 = vst [vmem:[#allocation7 + $0x8] sm:$0xff] %v694
      %727 = vst [vmem:[#allocation7 + $0x10] sm:$0xff] %v695
      %728 = vst [vmem:[#allocation7 + $0x18] sm:$0xff] %v696
      %729 = vst [vmem:[#allocation7 + $0x20] sm:$0xff] %v697
      %730 = vst [vmem:[#allocation7 + $0x28] sm:$0xff] %v698
      %731 = vst [vmem:[#allocation7 + $0x30] sm:$0xff] %v699
      %732 = vst [vmem:[#allocation7 + $0x38] sm:$0xff] %v700
      %733 = vst [vmem:[#allocation7 + $0x40] sm:$0xff] %v701
      %734 = vst [vmem:[#allocation7 + $0x48] sm:$0xff] %v702
      %735 = vst [vmem:[#allocation7 + $0x50] sm:$0xff] %v703
      %736 = vst [vmem:[#allocation7 + $0x58] sm:$0xff] %v704
      %737 = vst [vmem:[#allocation7 + $0x60] sm:$0xff] %v705
      %738 = vst [vmem:[#allocation7 + $0x68] sm:$0xff] %v706
      %739 = vst [vmem:[#allocation7 + $0x70] sm:$0xff] %v707
      %740 = vst [vmem:[#allocation7 + $0x78] sm:$0xff] %v708
      %741 = vst [vmem:[#allocation7 + $0x80] sm:$0xff] %v709
      %742 = vst [vmem:[#allocation7 + $0x88] sm:$0xff] %v710
      %743 = vst [vmem:[#allocation7 + $0x90] sm:$0xff] %v711
      %744 = vst [vmem:[#allocation7 + $0x98] sm:$0xff] %v712
      %745 = vst [vmem:[#allocation7 + $0xa0] sm:$0xff] %v713
      %746 = vst [vmem:[#allocation7 + $0xa8] sm:$0xff] %v714
      %747 = vst [vmem:[#allocation7 + $0xb0] sm:$0xff] %v715
      %748 = vst [vmem:[#allocation7 + $0xb8] sm:$0xff] %v716
      %749 = vst [vmem:[#allocation7 + $0xc0] sm:$0xff] %v717
      %750 = vst [vmem:[#allocation7 + $0xc8] sm:$0xff] %v718
      %751 = vst [vmem:[#allocation7 + $0xd0] sm:$0xff] %v719
      %752 = vst [vmem:[#allocation7 + $0xd8] sm:$0xff] %v720
      %753 = vst [vmem:[#allocation7 + $0xe0] sm:$0xff] %v721
      %754 = vst [vmem:[#allocation7 + $0xe8] sm:$0xff] %v722
      %755 = vst [vmem:[#allocation7 + $0xf0] sm:$0xff] %v723
      %756 = vst [vmem:[#allocation7 + $0xf8] sm:$0xff] %v724
    $region29: #{tpu_custom_call.1} parent=1 // pred_fallthru
      _
    // Predicated region
    $region30: #{tpu_custom_call.1} parent=1 // pred_check
      _
    $region31: #{tpu_custom_call.1} parent=1 // pred_check_branch
      %758 = sbr.rel (0) target = $region33
    $region32: #{tpu_custom_call.1} parent=1 // pred_region
      %s760 = ssub.s32 4096, 3200
      %761 = vsyncadd [#allocation4], %s760
      %s762 = sshll.u32 [#allocation7], 4
      %s763 = int_to_ptr.vmem [resolvable:$true] %s762
      %768 = dma.vmem_to_hbm [thread:$0]  %s763, 3200, %s3, [#allocation4], 128, 128, 8
    $region33: #{tpu_custom_call.1} parent=1 // pred_fallthru
      _
    // Predicated region
    $region34: #{tpu_custom_call.1} parent=1 // pred_check
      _
    $region35: #{tpu_custom_call.1} parent=1 // pred_check_branch
      %770 = sbr.rel (0) target = $region37
    $region36: #{tpu_custom_call.1} parent=1 // pred_region
      %771 = dma.done [#allocation4], 4096
    $region37: #{tpu_custom_call.1} parent=1 // pred_fallthru
      _
    %772 = vsyncpa [#allocation3], 1
    %773 = vsyncpa [#allocation6], 1
    %774 = vsyncpa [#allocation4], 1

</llo_original>
